<compile_context>
chip_gen: v7x
topology: tpu7x:2x2x1
jax: 0.10.0
libtpu: 0.0.40
codegen_flags: <defaults>
</compile_context>

<pallas_src>
import functools

import numpy as np
import jax
import jax.numpy as jnp
from jax import lax
from jax.experimental import pallas as pl
from jax.experimental.pallas import tpu as pltpu

NEG_SLOPE = 0.01                 # F.leaky_relu default negative_slope
SQRT_HALF = float(np.sqrt(0.5))  # FeatureTransformer residual scale


def _round_up(x, m):
    return (x + m - 1) // m * m


def _cdiv(a, b):
    return -(-a // b)


# ----------------------------- Pallas kernel --------------------------------
def _decision_step_kernel(
    x_ref, a_ref, priors_ref, w_att_ref, t_att_ref, *rest,
    n_ind, relax, batch, block_cols, fold_bn_scale,
):
    # Unpack remaining refs (inputs then outputs); arity depends on whether the
    # BN scales were folded into the weights host-side.
    if fold_bn_scale:
        (w_fc_ref, b_fc_ref, t_fc_ref,
         wgl_ref, bgl_ref, tgl_ref,
         wgg_ref, bgg_ref, tgg_ref,
         h_out_ref, loss_ref, priors_out_ref) = rest
        s_fc_ref = sgl_ref = sgg_ref = None
    else:
        (w_fc_ref, b_fc_ref, s_fc_ref, t_fc_ref,
         wgl_ref, bgl_ref, sgl_ref, tgl_ref,
         wgg_ref, bgg_ref, sgg_ref, tgg_ref,
         h_out_ref, loss_ref, priors_out_ref) = rest

    priors = priors_ref[...]                                   # f32 (inp, TB)

    # ---- AttentionTransformer: mask = sigmoid(GBN(Linear(a)) * priors) ----
    # Bias + BN folded host-side into (W_att', t_att'); feature-major dot:
    # (inp, n_a) @ (n_a, TB) -> (inp, TB), bf16 operands, f32 accumulation.
    a_bn = jnp.dot(w_att_ref[...], a_ref[...],
                   preferred_element_type=jnp.float32) + t_att_ref[...]
    mask = jax.nn.sigmoid(a_bn * priors)                       # f32 (inp, TB)
    priors_out_ref[...] = priors * (relax - mask)

    # ---- per-block partial sparsity loss (padded batch columns masked) ----
    col0 = pl.program_id(0) * block_cols
    cols = col0 + lax.broadcasted_iota(jnp.int32, (1, block_cols), 1)
    valid = cols < batch
    neg_ent = jnp.where(valid, -mask * jnp.log(mask + 1e-10), 0.0)
    loss_ref[...] = jnp.reshape(jnp.sum(neg_ent), (1, 1, 1))

    def _bias_leaky_bn(z, b, s, t):
        # z = leaky_relu(z + b); BN scale either folded into (W, b) host-side
        # (s is None) or applied here; then BN shift.
        z = z + b
        z = jnp.maximum(z, NEG_SLOPE * z)
        if s is not None:
            z = z * s
        return z + t

    # ---- FeatureTransformer stem (shared=None): BN(leaky_relu(Lin(x*mask))) --
    xm = (x_ref[...].astype(jnp.float32) * mask).astype(w_fc_ref.dtype)
    h = jnp.dot(w_fc_ref[...], xm, preferred_element_type=jnp.float32)
    h = _bias_leaky_bn(h, b_fc_ref[...],
                       None if s_fc_ref is None else s_fc_ref[...],
                       t_fc_ref[...])

    # ---- n_ind GLU residual blocks; weights pre-split & pre-transposed ----
    def glu_block(i, h):
        hq = h.astype(wgl_ref.dtype)
        zl = jnp.dot(wgl_ref[i], hq, preferred_element_type=jnp.float32)
        zl = _bias_leaky_bn(zl, bgl_ref[i],
                            None if sgl_ref is None else sgl_ref[i],
                            tgl_ref[i])
        zg = jnp.dot(wgg_ref[i], hq, preferred_element_type=jnp.float32)
        zg = _bias_leaky_bn(zg, bgg_ref[i],
                            None if sgg_ref is None else sgg_ref[i],
                            tgg_ref[i])
        return (h + zl * jax.nn.sigmoid(zg)) * SQRT_HALF

    if n_ind <= 4:
        for i in range(n_ind):
            h = glu_block(i, h)
    else:
        # Bound vreg live ranges for deep stacks while keeping LLO visibility.
        h = lax.fori_loop(0, n_ind, glu_block, h, unroll=True)

    h_out_ref[...] = h.astype(h_out_ref.dtype)


# ----------------------------- tiling heuristics -----------------------------
def _choose_block_cols(batch, inp_dim, n_a, out_dim, max_cols=16384):
    """Generation-aware batch-column tile size + VMEM limit."""
    try:
        vmem_cap = int(pltpu.get_tpu_info().vmem_capacity_bytes)
    except Exception:  # pragma: no cover - conservative fallback
        vmem_cap = 64 * 1024 * 1024
    if vmem_cap >= 96 * 1024 * 1024:       # v5e / v6e: 128 MiB physical
        vmem_limit = 100 * 1024 * 1024
    else:                                   # v7x: 64 MiB physical per TC
        vmem_limit = 40 * 1024 * 1024
    budget = vmem_limit - 8 * 1024 * 1024   # headroom: weights + compiler scratch

    # Streamed bytes per batch column (double-buffered activation tiles only;
    # vreg-resident f32 intermediates are not separately allocated in VMEM).
    per_col = 2 * (2 * inp_dim + 2 * n_a          # x, a in (bf16)
                   + 4 * inp_dim                  # priors in (f32)
                   + 4 * out_dim + 4 * inp_dim)   # h, priors out (f32)
    tb = budget // max(per_col, 1)
    tb = min(int(tb), max_cols, _round_up(batch, 128))
    # Keep >= 4 grid steps when the batch allows it: both v7x TensorCores get
    # work under the "parallel" split and the DMA pipeline has steps to overlap.
    tb = min(tb, max(128, _round_up(_cdiv(batch, 4), 128)))
    tb = max(128, (tb // 128) * 128)        # lane-dense multiple of 128
    return tb, vmem_limit


# ------------------------------ host wrapper ---------------------------------
def decision_step(x, a, priors, kparams, *, n_d, n_a, n_ind, relax,
                  block_cols=None):
    B, inp_dim = x.shape
    out_dim = n_d + n_a
    compute_dtype = kparams["w_att"].dtype
    fold = kparams["fold_bn_scale"]

    tb_auto, vmem_limit = _choose_block_cols(B, inp_dim, n_a, out_dim)
    tb = block_cols or tb_auto
    b_pad = _round_up(B, tb)
    num_blocks = b_pad // tb

    # Feature-major activations: (feat, batch); pad batch (lane) axis.
    x_t = x.T.astype(compute_dtype)
    a_t = a.T.astype(compute_dtype)
    p_t = priors.T.astype(jnp.float32)
    if b_pad != B:
        pad = ((0, 0), (0, b_pad - B))
        x_t = jnp.pad(x_t, pad)
        a_t = jnp.pad(a_t, pad)
        p_t = jnp.pad(p_t, pad)

    if fold:
        weights = [kparams["w_att"], kparams["t_att"],
                   kparams["w_fc"], kparams["b_fc"], kparams["t_fc"],
                   kparams["wg_lin"], kparams["bg_lin"], kparams["tg_lin"],
                   kparams["wg_gate"], kparams["bg_gate"], kparams["tg_gate"]]
    else:
        weights = [kparams["w_att"], kparams["t_att"],
                   kparams["w_fc"], kparams["b_fc"], kparams["s_fc"],
                   kparams["t_fc"],
                   kparams["wg_lin"], kparams["bg_lin"], kparams["sg_lin"],
                   kparams["tg_lin"],
                   kparams["wg_gate"], kparams["bg_gate"], kparams["sg_gate"],
                   kparams["tg_gate"]]
    inputs = (x_t, a_t, p_t, *weights)

    def col_spec(feat):                       # batch-column-tiled activations
        return pl.BlockSpec((feat, tb), lambda i: (0, i))

    def const_spec(shape):                    # VMEM-resident weights / affines
        # NOTE: could add pipeline_mode=pl.Buffered(1) to drop the redundant
        # second weight buffer on v7x; weights are tiny here so skipped.
        return pl.BlockSpec(shape, lambda i, _nd=len(shape): (0,) * _nd)

    in_specs = [col_spec(inp_dim), col_spec(n_a), col_spec(inp_dim)]
    in_specs += [const_spec(v.shape) for v in weights]

    out_shape = (
        jax.ShapeDtypeStruct((out_dim, b_pad), jnp.float32),     # h (feat-major)
        jax.ShapeDtypeStruct((num_blocks, 1, 1), jnp.float32),   # loss partials
        jax.ShapeDtypeStruct((inp_dim, b_pad), jnp.float32),     # new priors
    )
    out_specs = (
        col_spec(out_dim),
        pl.BlockSpec((1, 1, 1), lambda i: (i, 0, 0)),
        col_spec(inp_dim),
    )

    kernel = functools.partial(
        _decision_step_kernel, n_ind=n_ind, relax=float(relax),
        batch=B, block_cols=tb, fold_bn_scale=fold)

    h_t, loss_parts, priors_t = pl.pallas_call(
        kernel,
        out_shape=out_shape,
        grid=(num_blocks,),
        in_specs=in_specs,
        out_specs=out_specs,
        input_output_aliases={2: 2},          # priors updated in place
        compiler_params=pltpu.CompilerParams(
            dimension_semantics=("parallel",),
            vmem_limit_bytes=vmem_limit,
        ),
    )(*inputs)

    loss = jnp.sum(loss_parts) / (B * inp_dim)
    return h_t[:, :B].T, loss, priors_t[:, :B].T


# ----------------------------- pure-JAX reference ----------------------------
def decision_step_ref(x, a, priors, raw, *, n_d, n_a, n_ind, relax):
    out_dim = n_d + n_a
    a_bn = (a @ raw["w_att"] + raw["b_att"]) * raw["s_att"] + raw["t_att"]
    mask = jax.nn.sigmoid(a_bn * priors)
    new_priors = priors * (relax - mask)
    loss = jnp.mean(-mask * jnp.log(mask + 1e-10))
    h = (x * mask) @ raw["w_fc"] + raw["b_fc"]
    h = jnp.where(h >= 0, h, NEG_SLOPE * h)
    h = h * raw["s_fc"] + raw["t_fc"]
    for i in range(n_ind):
        z = h @ raw["wg"][i] + raw["bg"][i]
        z = jnp.where(z >= 0, z, NEG_SLOPE * z)
        z = z * raw["sg"][i] + raw["tg"][i]
        h = (h + z[:, :out_dim] * jax.nn.sigmoid(z[:, out_dim:])) * SQRT_HALF
    return h, loss, new_priors


# ----------------------------- deterministic params --------------------------
def _linear_params(key, fan_in, fan_out):
    k1, k2 = jax.random.split(key)
    bound = 1.0 / np.sqrt(fan_in)
    w = jax.random.uniform(k1, (fan_in, fan_out), minval=-bound, maxval=bound)
    b = jax.random.uniform(k2, (1, fan_out), minval=-bound, maxval=bound)
    return w.astype(jnp.float32), b.astype(jnp.float32)


def _bn_affine(key, n, eps=1e-5):
    k1, k2, k3, k4 = jax.random.split(key, 4)
    gamma = jax.random.uniform(k1, (n,), minval=0.5, maxval=1.5)
    beta = 0.1 * jax.random.normal(k2, (n,))
    mean = 0.1 * jax.random.normal(k3, (n,))
    var = jax.random.uniform(k4, (n,), minval=0.5, maxval=1.5)
    scale = gamma / jnp.sqrt(var + eps)
    shift = beta - mean * scale
    return (scale.reshape(1, n).astype(jnp.float32),
            shift.reshape(1, n).astype(jnp.float32))


def init_params(key, inp_dim, n_d, n_a, n_ind):
    """Raw (unfused, f32) parameters matching the PyTorch module layout."""
    out_dim = n_d + n_a
    keys = jax.random.split(key, 4 + 2 * n_ind)
    w_att, b_att = _linear_params(keys[0], n_a, inp_dim)
    s_att, t_att = _bn_affine(keys[1], inp_dim)
    w_fc, b_fc = _linear_params(keys[2], inp_dim, out_dim)
    s_fc, t_fc = _bn_affine(keys[3], out_dim)
    wgs, bgs, sgs, tgs = [], [], [], []
    for i in range(n_ind):
        wg, bg = _linear_params(keys[4 + 2 * i], out_dim, 2 * out_dim)
        sg, tg = _bn_affine(keys[5 + 2 * i], 2 * out_dim)
        wgs.append(wg[None]); bgs.append(bg[None]); sgs.append(sg[None]); tgs.append(tg[None])
    return {
        "w_att": w_att, "b_att": b_att, "s_att": s_att, "t_att": t_att,
        "w_fc": w_fc, "b_fc": b_fc, "s_fc": s_fc, "t_fc": t_fc,
        "wg": jnp.concatenate(wgs, 0),   # (n_ind, out_dim, 2*out_dim)
        "bg": jnp.concatenate(bgs, 0),   # (n_ind, 1, 2*out_dim)
        "sg": jnp.concatenate(sgs, 0),
        "tg": jnp.concatenate(tgs, 0),
    }


def prepare_kernel_params(raw, out_dim, compute_dtype=jnp.bfloat16):
    """Feature-major, fused kernel parameters.

    * Attention bias + BN always fold into (W_att', t_att') (no nonlinearity
      in between).
    * FeatureTransformer / GLU BN scales fold into the preceding weight+bias
      via leaky_relu's positive homogeneity, guarded on scale > 0 elementwise
      (falls back to in-kernel scale multiply otherwise).
    * All weights are transposed to feature-major (out, in) and matmul
      operands cast to the compute dtype (bf16 by default); biases/shifts are
      kept f32 as (feat, 1) columns.
    """
    def col(v):   # (1, n) row -> (n, 1) f32 column
        return jnp.asarray(v, jnp.float32).reshape(-1, 1)

    def col3(v):  # (n_ind, 1, n) -> (n_ind, n, 1) f32
        return jnp.swapaxes(jnp.asarray(v, jnp.float32), 1, 2)

    # Attention: fold bias + BN into the weight (always valid).
    w_att_f = (raw["w_att"] * raw["s_att"]).T.astype(compute_dtype)   # (inp, n_a)
    t_att_f = col(raw["b_att"] * raw["s_att"] + raw["t_att"])         # (inp, 1)

    s_fc = raw["s_fc"]
    sg_lin = raw["sg"][..., :out_dim]
    sg_gate = raw["sg"][..., out_dim:]
    fold = bool(np.all(np.asarray(s_fc) > 0)
                and np.all(np.asarray(sg_lin) > 0)
                and np.all(np.asarray(sg_gate) > 0))

    wg_lin = raw["wg"][..., :out_dim]      # (n_ind, out_dim, out_dim)
    wg_gate = raw["wg"][..., out_dim:]
    bg_lin = raw["bg"][..., :out_dim]      # (n_ind, 1, out_dim)
    bg_gate = raw["bg"][..., out_dim:]

    if fold:
        w_fc_eff, b_fc_eff = raw["w_fc"] * s_fc, raw["b_fc"] * s_fc
        wgl_eff, bgl_eff = wg_lin * sg_lin, bg_lin * sg_lin
        wgg_eff, bgg_eff = wg_gate * sg_gate, bg_gate * sg_gate
    else:
        w_fc_eff, b_fc_eff = raw["w_fc"], raw["b_fc"]
        wgl_eff, bgl_eff = wg_lin, bg_lin
        wgg_eff, bgg_eff = wg_gate, bg_gate

    kp = {
        "fold_bn_scale": fold,
        "w_att": w_att_f, "t_att": t_att_f,
        "w_fc": w_fc_eff.T.astype(compute_dtype),                    # (out, inp)
        "b_fc": col(b_fc_eff), "t_fc": col(raw["t_fc"]),
        "wg_lin": jnp.swapaxes(wgl_eff, 1, 2).astype(compute_dtype),  # (n_ind,out,out)
        "bg_lin": col3(bgl_eff), "tg_lin": col3(raw["tg"][..., :out_dim]),
        "wg_gate": jnp.swapaxes(wgg_eff, 1, 2).astype(compute_dtype),
        "bg_gate": col3(bgg_eff), "tg_gate": col3(raw["tg"][..., out_dim:]),
    }
    if not fold:
        kp["s_fc"] = col(s_fc)
        kp["sg_lin"] = col3(sg_lin)
        kp["sg_gate"] = col3(sg_gate)
    return kp


# ----------------------------------- main ------------------------------------
if __name__ == "__main__":
    B, inp_dim, n_d, n_a, n_ind = 8, 16, 8, 8, 2
    relax = 1.3

    key = jax.random.PRNGKey(0)
    kx, ka, kp_key = jax.random.split(key, 3)
    x = jax.random.normal(kx, (B, inp_dim), dtype=jnp.float32)
    a = jax.random.normal(ka, (B, n_a), dtype=jnp.float32)
    priors = jnp.ones((B, inp_dim), dtype=jnp.float32)

    raw = init_params(kp_key, inp_dim, n_d, n_a, n_ind)
    kparams = prepare_kernel_params(raw, n_d + n_a)

    # Pure-JAX f32 reference.
    h_r, loss_r, priors_r = decision_step_ref(
        x, a, priors, raw, n_d=n_d, n_a=n_a, n_ind=n_ind, relax=relax)

    h, loss, new_priors = decision_step(
        x, a, priors, kparams, n_d=n_d, n_a=n_a, n_ind=n_ind, relax=relax)
    jax.block_until_ready((h, loss, new_priors))

    # bf16 matmul operands with f32 accumulation -> compare at ~1e-2 level.
    np.testing.assert_allclose(np.asarray(h), np.asarray(h_r), rtol=2e-2, atol=2e-2)
    np.testing.assert_allclose(np.asarray(loss), np.asarray(loss_r), rtol=2e-2, atol=2e-2)
    np.testing.assert_allclose(np.asarray(new_priors), np.asarray(priors_r),
                               rtol=2e-2, atol=2e-2)

    print("KERNEL_OK")
</pallas_src>

<mosaic_0001>
module attributes {stable_mosaic.version = 11 : i64} {
  func.func @_decision_step_kernel(%arg0: i32, %arg1: memref<16x128xbf16, #tpu.memory_space<vmem>>, %arg2: memref<8x128xbf16, #tpu.memory_space<vmem>>, %arg3: memref<16x128xf32, #tpu.memory_space<vmem>>, %arg4: memref<16x8xbf16, #tpu.memory_space<vmem>>, %arg5: memref<16x1xf32, #tpu.memory_space<vmem>>, %arg6: memref<16x16xbf16, #tpu.memory_space<vmem>>, %arg7: memref<16x1xf32, #tpu.memory_space<vmem>>, %arg8: memref<16x1xf32, #tpu.memory_space<vmem>>, %arg9: memref<2x16x16xbf16, #tpu.memory_space<vmem>>, %arg10: memref<2x16x1xf32, #tpu.memory_space<vmem>>, %arg11: memref<2x16x1xf32, #tpu.memory_space<vmem>>, %arg12: memref<2x16x16xbf16, #tpu.memory_space<vmem>>, %arg13: memref<2x16x1xf32, #tpu.memory_space<vmem>>, %arg14: memref<2x16x1xf32, #tpu.memory_space<vmem>>, %arg15: memref<16x128xf32, #tpu.memory_space<vmem>>, %arg16: memref<1x1x1xf32, #tpu.memory_space<vmem>>, %arg17: memref<16x128xf32, #tpu.memory_space<vmem>>) attributes {dimension_semantics = [#tpu.dimension_semantics<parallel>], iteration_bounds = array<i64: 1>, scalar_prefetch = 0 : i64, scratch_operands = 0 : i64, tpu.core_type = #tpu.core_type<tc>, window_params = [{transform_indices = @transform_0, window_bounds = array<i64: 16, 128>}, {transform_indices = @transform_1, window_bounds = array<i64: 8, 128>}, {transform_indices = @transform_2, window_bounds = array<i64: 16, 128>}, {pipeline_mode = #tpu.pipeline_mode<synchronous>, transform_indices = @transform_3, window_bounds = array<i64: 16, 8>}, {pipeline_mode = #tpu.pipeline_mode<synchronous>, transform_indices = @transform_4, window_bounds = array<i64: 16, 1>}, {pipeline_mode = #tpu.pipeline_mode<synchronous>, transform_indices = @transform_5, window_bounds = array<i64: 16, 16>}, {pipeline_mode = #tpu.pipeline_mode<synchronous>, transform_indices = @transform_6, window_bounds = array<i64: 16, 1>}, {pipeline_mode = #tpu.pipeline_mode<synchronous>, transform_indices = @transform_7, window_bounds = array<i64: 16, 1>}, {pipeline_mode = #tpu.pipeline_mode<synchronous>, transform_indices = @transform_8, window_bounds = array<i64: 2, 16, 16>}, {pipeline_mode = #tpu.pipeline_mode<synchronous>, transform_indices = @transform_9, window_bounds = array<i64: 2, 16, 1>}, {pipeline_mode = #tpu.pipeline_mode<synchronous>, transform_indices = @transform_10, window_bounds = array<i64: 2, 16, 1>}, {pipeline_mode = #tpu.pipeline_mode<synchronous>, transform_indices = @transform_11, window_bounds = array<i64: 2, 16, 16>}, {pipeline_mode = #tpu.pipeline_mode<synchronous>, transform_indices = @transform_12, window_bounds = array<i64: 2, 16, 1>}, {pipeline_mode = #tpu.pipeline_mode<synchronous>, transform_indices = @transform_13, window_bounds = array<i64: 2, 16, 1>}, {transform_indices = @transform_14, window_bounds = array<i64: 16, 128>}, {transform_indices = @transform_15, window_bounds = array<i64: 1, 1, 1>}, {transform_indices = @transform_16, window_bounds = array<i64: 16, 128>}]} {
    %c0 = arith.constant 0 : index
    %c0_0 = arith.constant 0 : index
    %0 = vector.load %arg3[%c0, %c0_0] : memref<16x128xf32, #tpu.memory_space<vmem>>, vector<16x128xf32>
    %c0_1 = arith.constant 0 : index
    %c0_2 = arith.constant 0 : index
    %1 = vector.load %arg4[%c0_1, %c0_2] : memref<16x8xbf16, #tpu.memory_space<vmem>>, vector<16x8xbf16>
    %c0_3 = arith.constant 0 : index
    %c0_4 = arith.constant 0 : index
    %2 = vector.load %arg2[%c0_3, %c0_4] : memref<8x128xbf16, #tpu.memory_space<vmem>>, vector<8x128xbf16>
    %cst = arith.constant dense<0.000000e+00> : vector<16x128xf32>
    %3 = tpu.matmul %1, %2, %cst {dimension_numbers = #tpu.dot_dimension_numbers<[1], [0], [0], [1], [0, 0, 1, 1], [], []>} : vector<16x8xbf16>, vector<8x128xbf16>, vector<16x128xf32> -> vector<16x128xf32>
    %c0_5 = arith.constant 0 : index
    %c0_6 = arith.constant 0 : index
    %4 = vector.load %arg5[%c0_5, %c0_6] : memref<16x1xf32, #tpu.memory_space<vmem>>, vector<16x1xf32>
    %5 = vector.broadcast %4 : vector<16x1xf32> to vector<16x128xf32>
    %6 = arith.addf %3, %5 : vector<16x128xf32>
    %7 = arith.mulf %6, %0 : vector<16x128xf32>
    %8 = arith.negf %7 : vector<16x128xf32>
    %9 = math.exp %8 : vector<16x128xf32>
    %cst_7 = arith.constant 1.000000e+00 : f32
    %10 = vector.broadcast %cst_7 : f32 to vector<16x128xf32>
    %11 = arith.addf %10, %9 : vector<16x128xf32>
    %12 = arith.divf %10, %11 : vector<16x128xf32>
    %cst_8 = arith.constant 1.300000e+00 : f32
    %13 = vector.broadcast %cst_8 : f32 to vector<16x128xf32>
    %14 = arith.subf %13, %12 : vector<16x128xf32>
    %15 = arith.mulf %0, %14 : vector<16x128xf32>
    %c0_9 = arith.constant 0 : index
    %c0_10 = arith.constant 0 : index
    %16 = vector.load %arg17[%c0_9, %c0_10] : memref<16x128xf32, #tpu.memory_space<vmem>>, vector<16x128xf32>
    tpu.vector_store %arg17[%c0_9, %c0_10], %15 {strides = array<i32>} : memref<16x128xf32, #tpu.memory_space<vmem>>, vector<16x128xf32>,
    %c128_i32 = arith.constant 128 : i32
    %17 = arith.muli %arg0, %c128_i32 : i32
    %18 = tpu.iota {dimensions = array<i32: 1>} : vector<1x128xi32>
    %19 = vector.broadcast %17 : i32 to vector<1x128xi32>
    %20 = arith.addi %19, %18 : vector<1x128xi32>
    %c8_i32 = arith.constant 8 : i32
    %21 = vector.broadcast %c8_i32 : i32 to vector<1x128xi32>
    %22 = arith.cmpi slt, %20, %21 : vector<1x128xi32>
    %cst_11 = arith.constant 0.000000e+00 : f32
    %23 = vector.broadcast %cst_11 : f32 to vector<16x128xf32>
    %24 = arith.subf %23, %12 : vector<16x128xf32>
    %cst_12 = arith.constant 1.000000e-10 : f32
    %25 = vector.broadcast %cst_12 : f32 to vector<16x128xf32>
    %26 = arith.addf %12, %25 : vector<16x128xf32>
    %27 = math.log %26 : vector<16x128xf32>
    %28 = arith.mulf %24, %27 : vector<16x128xf32>
    %cst_13 = arith.constant 0.000000e+00 : f32
    %29 = vector.shape_cast %22 : vector<1x128xi1> to vector<1x128xi1>
    %30 = vector.broadcast %29 : vector<1x128xi1> to vector<16x128xi1>
    %31 = vector.broadcast %cst_13 : f32 to vector<16x128xf32>
    %32 = arith.select %30, %28, %31 : vector<16x128xi1>, vector<16x128xf32>
    %33 = vector.shape_cast %32 : vector<16x128xf32> to vector<1x16x128xf32>
    %cst_14 = arith.constant dense<0.000000e+00> : vector<1xf32>
    %34 = vector.multi_reduction <add>, %33, %cst_14 [1, 2] : vector<1x16x128xf32> to vector<1xf32>
    %35 = vector.shape_cast %34 : vector<1xf32> to vector<1x1x1xf32>
    %36 = vector.extract %35[0, 0, 0] : f32 from vector<1x1x1xf32>
    %37 = vector.broadcast %36 : f32 to vector<1x1x1xf32>
    %c0_15 = arith.constant 0 : index
    %c0_16 = arith.constant 0 : index
    %c0_17 = arith.constant 0 : index
    %38 = vector.load %arg16[%c0_15, %c0_16, %c0_17] : memref<1x1x1xf32, #tpu.memory_space<vmem>>, vector<1x1x1xf32>
    tpu.vector_store %arg16[%c0_15, %c0_16, %c0_17], %37 {strides = array<i32>} : memref<1x1x1xf32, #tpu.memory_space<vmem>>, vector<1x1x1xf32>,
    %c0_18 = arith.constant 0 : index
    %c0_19 = arith.constant 0 : index
    %39 = vector.load %arg1[%c0_18, %c0_19] : memref<16x128xbf16, #tpu.memory_space<vmem>>, vector<16x128xbf16>
    %40 = arith.extf %39 : vector<16x128xbf16> to vector<16x128xf32>
    %41 = arith.mulf %40, %12 : vector<16x128xf32>
    %42 = arith.truncf %41 : vector<16x128xf32> to vector<16x128xbf16>
    %c0_20 = arith.constant 0 : index
    %c0_21 = arith.constant 0 : index
    %43 = vector.load %arg6[%c0_20, %c0_21] : memref<16x16xbf16, #tpu.memory_space<vmem>>, vector<16x16xbf16>
    %cst_22 = arith.constant dense<0.000000e+00> : vector<16x128xf32>
    %44 = tpu.matmul %43, %42, %cst_22 {dimension_numbers = #tpu.dot_dimension_numbers<[1], [0], [0], [1], [0, 0, 1, 1], [], []>} : vector<16x16xbf16>, vector<16x128xbf16>, vector<16x128xf32> -> vector<16x128xf32>
    %c0_23 = arith.constant 0 : index
    %c0_24 = arith.constant 0 : index
    %45 = vector.load %arg7[%c0_23, %c0_24] : memref<16x1xf32, #tpu.memory_space<vmem>>, vector<16x1xf32>
    %c0_25 = arith.constant 0 : index
    %c0_26 = arith.constant 0 : index
    %46 = vector.load %arg8[%c0_25, %c0_26] : memref<16x1xf32, #tpu.memory_space<vmem>>, vector<16x1xf32>
    %47 = vector.broadcast %45 : vector<16x1xf32> to vector<16x128xf32>
    %48 = arith.addf %44, %47 : vector<16x128xf32>
    %cst_27 = arith.constant 0.00999999977 : f32
    %49 = vector.broadcast %cst_27 : f32 to vector<16x128xf32>
    %50 = arith.mulf %49, %48 : vector<16x128xf32>
    %51 = arith.maximumf %48, %50 : vector<16x128xf32>
    %52 = vector.broadcast %46 : vector<16x1xf32> to vector<16x128xf32>
    %53 = arith.addf %51, %52 : vector<16x128xf32>
    %54 = arith.truncf %53 : vector<16x128xf32> to vector<16x128xbf16>
    %c0_28 = arith.constant 0 : index
    %c0_29 = arith.constant 0 : index
    %c0_30 = arith.constant 0 : index
    %55 = vector.load %arg9[%c0_28, %c0_29, %c0_30] : memref<2x16x16xbf16, #tpu.memory_space<vmem>>, vector<1x16x16xbf16>
    %56 = vector.shape_cast %55 : vector<1x16x16xbf16> to vector<16x16xbf16>
    %cst_31 = arith.constant dense<0.000000e+00> : vector<16x128xf32>
    %57 = tpu.matmul %56, %54, %cst_31 {dimension_numbers = #tpu.dot_dimension_numbers<[1], [0], [0], [1], [0, 0, 1, 1], [], []>} : vector<16x16xbf16>, vector<16x128xbf16>, vector<16x128xf32> -> vector<16x128xf32>
    %c0_32 = arith.constant 0 : index
    %c0_33 = arith.constant 0 : index
    %c0_34 = arith.constant 0 : index
    %58 = vector.load %arg10[%c0_32, %c0_33, %c0_34] : memref<2x16x1xf32, #tpu.memory_space<vmem>>, vector<1x16x1xf32>
    %59 = vector.shape_cast %58 : vector<1x16x1xf32> to vector<16x1xf32>
    %c0_35 = arith.constant 0 : index
    %c0_36 = arith.constant 0 : index
    %c0_37 = arith.constant 0 : index
    %60 = vector.load %arg11[%c0_35, %c0_36, %c0_37] : memref<2x16x1xf32, #tpu.memory_space<vmem>>, vector<1x16x1xf32>
    %61 = vector.shape_cast %60 : vector<1x16x1xf32> to vector<16x1xf32>
    %62 = vector.broadcast %59 : vector<16x1xf32> to vector<16x128xf32>
    %63 = arith.addf %57, %62 : vector<16x128xf32>
    %cst_38 = arith.constant 0.00999999977 : f32
    %64 = vector.broadcast %cst_38 : f32 to vector<16x128xf32>
    %65 = arith.mulf %64, %63 : vector<16x128xf32>
    %66 = arith.maximumf %63, %65 : vector<16x128xf32>
    %67 = vector.broadcast %61 : vector<16x1xf32> to vector<16x128xf32>
    %68 = arith.addf %66, %67 : vector<16x128xf32>
    %c0_39 = arith.constant 0 : index
    %c0_40 = arith.constant 0 : index
    %c0_41 = arith.constant 0 : index
    %69 = vector.load %arg12[%c0_39, %c0_40, %c0_41] : memref<2x16x16xbf16, #tpu.memory_space<vmem>>, vector<1x16x16xbf16>
    %70 = vector.shape_cast %69 : vector<1x16x16xbf16> to vector<16x16xbf16>
    %cst_42 = arith.constant dense<0.000000e+00> : vector<16x128xf32>
    %71 = tpu.matmul %70, %54, %cst_42 {dimension_numbers = #tpu.dot_dimension_numbers<[1], [0], [0], [1], [0, 0, 1, 1], [], []>} : vector<16x16xbf16>, vector<16x128xbf16>, vector<16x128xf32> -> vector<16x128xf32>
    %c0_43 = arith.constant 0 : index
    %c0_44 = arith.constant 0 : index
    %c0_45 = arith.constant 0 : index
    %72 = vector.load %arg13[%c0_43, %c0_44, %c0_45] : memref<2x16x1xf32, #tpu.memory_space<vmem>>, vector<1x16x1xf32>
    %73 = vector.shape_cast %72 : vector<1x16x1xf32> to vector<16x1xf32>
    %c0_46 = arith.constant 0 : index
    %c0_47 = arith.constant 0 : index
    %c0_48 = arith.constant 0 : index
    %74 = vector.load %arg14[%c0_46, %c0_47, %c0_48] : memref<2x16x1xf32, #tpu.memory_space<vmem>>, vector<1x16x1xf32>
    %75 = vector.shape_cast %74 : vector<1x16x1xf32> to vector<16x1xf32>
    %76 = vector.broadcast %73 : vector<16x1xf32> to vector<16x128xf32>
    %77 = arith.addf %71, %76 : vector<16x128xf32>
    %cst_49 = arith.constant 0.00999999977 : f32
    %78 = vector.broadcast %cst_49 : f32 to vector<16x128xf32>
    %79 = arith.mulf %78, %77 : vector<16x128xf32>
    %80 = arith.maximumf %77, %79 : vector<16x128xf32>
    %81 = vector.broadcast %75 : vector<16x1xf32> to vector<16x128xf32>
    %82 = arith.addf %80, %81 : vector<16x128xf32>
    %83 = arith.negf %82 : vector<16x128xf32>
    %84 = math.exp %83 : vector<16x128xf32>
    %cst_50 = arith.constant 1.000000e+00 : f32
    %85 = vector.broadcast %cst_50 : f32 to vector<16x128xf32>
    %86 = arith.addf %85, %84 : vector<16x128xf32>
    %87 = arith.divf %85, %86 : vector<16x128xf32>
    %88 = arith.mulf %68, %87 : vector<16x128xf32>
    %89 = arith.addf %53, %88 : vector<16x128xf32>
    %cst_51 = arith.constant 0.707106769 : f32
    %90 = vector.broadcast %cst_51 : f32 to vector<16x128xf32>
    %91 = arith.mulf %89, %90 : vector<16x128xf32>
    %92 = arith.truncf %91 : vector<16x128xf32> to vector<16x128xbf16>
    %c1 = arith.constant 1 : index
    %c0_52 = arith.constant 0 : index
    %c0_53 = arith.constant 0 : index
    %93 = vector.load %arg9[%c1, %c0_52, %c0_53] : memref<2x16x16xbf16, #tpu.memory_space<vmem>>, vector<1x16x16xbf16>
    %94 = vector.shape_cast %93 : vector<1x16x16xbf16> to vector<16x16xbf16>
    %cst_54 = arith.constant dense<0.000000e+00> : vector<16x128xf32>
    %95 = tpu.matmul %94, %92, %cst_54 {dimension_numbers = #tpu.dot_dimension_numbers<[1], [0], [0], [1], [0, 0, 1, 1], [], []>} : vector<16x16xbf16>, vector<16x128xbf16>, vector<16x128xf32> -> vector<16x128xf32>
    %c1_55 = arith.constant 1 : index
    %c0_56 = arith.constant 0 : index
    %c0_57 = arith.constant 0 : index
    %96 = vector.load %arg10[%c1_55, %c0_56, %c0_57] : memref<2x16x1xf32, #tpu.memory_space<vmem>>, vector<1x16x1xf32>
    %97 = vector.shape_cast %96 : vector<1x16x1xf32> to vector<16x1xf32>
    %c1_58 = arith.constant 1 : index
    %c0_59 = arith.constant 0 : index
    %c0_60 = arith.constant 0 : index
    %98 = vector.load %arg11[%c1_58, %c0_59, %c0_60] : memref<2x16x1xf32, #tpu.memory_space<vmem>>, vector<1x16x1xf32>
    %99 = vector.shape_cast %98 : vector<1x16x1xf32> to vector<16x1xf32>
    %100 = vector.broadcast %97 : vector<16x1xf32> to vector<16x128xf32>
    %101 = arith.addf %95, %100 : vector<16x128xf32>
    %cst_61 = arith.constant 0.00999999977 : f32
    %102 = vector.broadcast %cst_61 : f32 to vector<16x128xf32>
    %103 = arith.mulf %102, %101 : vector<16x128xf32>
    %104 = arith.maximumf %101, %103 : vector<16x128xf32>
    %105 = vector.broadcast %99 : vector<16x1xf32> to vector<16x128xf32>
    %106 = arith.addf %104, %105 : vector<16x128xf32>
    %c1_62 = arith.constant 1 : index
    %c0_63 = arith.constant 0 : index
    %c0_64 = arith.constant 0 : index
    %107 = vector.load %arg12[%c1_62, %c0_63, %c0_64] : memref<2x16x16xbf16, #tpu.memory_space<vmem>>, vector<1x16x16xbf16>
    %108 = vector.shape_cast %107 : vector<1x16x16xbf16> to vector<16x16xbf16>
    %cst_65 = arith.constant dense<0.000000e+00> : vector<16x128xf32>
    %109 = tpu.matmul %108, %92, %cst_65 {dimension_numbers = #tpu.dot_dimension_numbers<[1], [0], [0], [1], [0, 0, 1, 1], [], []>} : vector<16x16xbf16>, vector<16x128xbf16>, vector<16x128xf32> -> vector<16x128xf32>
    %c1_66 = arith.constant 1 : index
    %c0_67 = arith.constant 0 : index
    %c0_68 = arith.constant 0 : index
    %110 = vector.load %arg13[%c1_66, %c0_67, %c0_68] : memref<2x16x1xf32, #tpu.memory_space<vmem>>, vector<1x16x1xf32>
    %111 = vector.shape_cast %110 : vector<1x16x1xf32> to vector<16x1xf32>
    %c1_69 = arith.constant 1 : index
    %c0_70 = arith.constant 0 : index
    %c0_71 = arith.constant 0 : index
    %112 = vector.load %arg14[%c1_69, %c0_70, %c0_71] : memref<2x16x1xf32, #tpu.memory_space<vmem>>, vector<1x16x1xf32>
    %113 = vector.shape_cast %112 : vector<1x16x1xf32> to vector<16x1xf32>
    %114 = vector.broadcast %111 : vector<16x1xf32> to vector<16x128xf32>
    %115 = arith.addf %109, %114 : vector<16x128xf32>
    %cst_72 = arith.constant 0.00999999977 : f32
    %116 = vector.broadcast %cst_72 : f32 to vector<16x128xf32>
    %117 = arith.mulf %116, %115 : vector<16x128xf32>
    %118 = arith.maximumf %115, %117 : vector<16x128xf32>
    %119 = vector.broadcast %113 : vector<16x1xf32> to vector<16x128xf32>
    %120 = arith.addf %118, %119 : vector<16x128xf32>
    %121 = arith.negf %120 : vector<16x128xf32>
    %122 = math.exp %121 : vector<16x128xf32>
    %cst_73 = arith.constant 1.000000e+00 : f32
    %123 = vector.broadcast %cst_73 : f32 to vector<16x128xf32>
    %124 = arith.addf %123, %122 : vector<16x128xf32>
    %125 = arith.divf %123, %124 : vector<16x128xf32>
    %126 = arith.mulf %106, %125 : vector<16x128xf32>
    %127 = arith.addf %91, %126 : vector<16x128xf32>
    %cst_74 = arith.constant 0.707106769 : f32
    %128 = vector.broadcast %cst_74 : f32 to vector<16x128xf32>
    %129 = arith.mulf %127, %128 : vector<16x128xf32>
    %c0_75 = arith.constant 0 : index
    %c0_76 = arith.constant 0 : index
    %130 = vector.load %arg15[%c0_75, %c0_76] : memref<16x128xf32, #tpu.memory_space<vmem>>, vector<16x128xf32>
    tpu.vector_store %arg15[%c0_75, %c0_76], %129 {strides = array<i32>} : memref<16x128xf32, #tpu.memory_space<vmem>>, vector<16x128xf32>,
    return
  }
  func.func @transform_0(%arg0: i32) -> (i32, i32) {
    %c0_i32 = arith.constant 0 : i32
    %c0_i32_0 = arith.constant 0 : i32
    return %c0_i32, %arg0 : i32, i32
  }
  func.func @transform_1(%arg0: i32) -> (i32, i32) {
    %c0_i32 = arith.constant 0 : i32
    %c0_i32_0 = arith.constant 0 : i32
    return %c0_i32, %arg0 : i32, i32
  }
  func.func @transform_2(%arg0: i32) -> (i32, i32) {
    %c0_i32 = arith.constant 0 : i32
    %c0_i32_0 = arith.constant 0 : i32
    return %c0_i32, %arg0 : i32, i32
  }
  func.func @transform_3(%arg0: i32) -> (i32, i32) {
    %c0_i32 = arith.constant 0 : i32
    %c0_i32_0 = arith.constant 0 : i32
    %c0_i32_1 = arith.constant 0 : i32
    return %c0_i32, %c0_i32_0 : i32, i32
  }
  func.func @transform_4(%arg0: i32) -> (i32, i32) {
    %c0_i32 = arith.constant 0 : i32
    %c0_i32_0 = arith.constant 0 : i32
    %c0_i32_1 = arith.constant 0 : i32
    return %c0_i32, %c0_i32_0 : i32, i32
  }
  func.func @transform_5(%arg0: i32) -> (i32, i32) {
    %c0_i32 = arith.constant 0 : i32
    %c0_i32_0 = arith.constant 0 : i32
    %c0_i32_1 = arith.constant 0 : i32
    return %c0_i32, %c0_i32_0 : i32, i32
  }
  func.func @transform_6(%arg0: i32) -> (i32, i32) {
    %c0_i32 = arith.constant 0 : i32
    %c0_i32_0 = arith.constant 0 : i32
    %c0_i32_1 = arith.constant 0 : i32
    return %c0_i32, %c0_i32_0 : i32, i32
  }
  func.func @transform_7(%arg0: i32) -> (i32, i32) {
    %c0_i32 = arith.constant 0 : i32
    %c0_i32_0 = arith.constant 0 : i32
    %c0_i32_1 = arith.constant 0 : i32
    return %c0_i32, %c0_i32_0 : i32, i32
  }
  func.func @transform_8(%arg0: i32) -> (i32, i32, i32) {
    %c0_i32 = arith.constant 0 : i32
    %c0_i32_0 = arith.constant 0 : i32
    %c0_i32_1 = arith.constant 0 : i32
    %c0_i32_2 = arith.constant 0 : i32
    return %c0_i32, %c0_i32_0, %c0_i32_1 : i32, i32, i32
  }
  func.func @transform_9(%arg0: i32) -> (i32, i32, i32) {
    %c0_i32 = arith.constant 0 : i32
    %c0_i32_0 = arith.constant 0 : i32
    %c0_i32_1 = arith.constant 0 : i32
    %c0_i32_2 = arith.constant 0 : i32
    return %c0_i32, %c0_i32_0, %c0_i32_1 : i32, i32, i32
  }
  func.func @transform_10(%arg0: i32) -> (i32, i32, i32) {
    %c0_i32 = arith.constant 0 : i32
    %c0_i32_0 = arith.constant 0 : i32
    %c0_i32_1 = arith.constant 0 : i32
    %c0_i32_2 = arith.constant 0 : i32
    return %c0_i32, %c0_i32_0, %c0_i32_1 : i32, i32, i32
  }
  func.func @transform_11(%arg0: i32) -> (i32, i32, i32) {
    %c0_i32 = arith.constant 0 : i32
    %c0_i32_0 = arith.constant 0 : i32
    %c0_i32_1 = arith.constant 0 : i32
    %c0_i32_2 = arith.constant 0 : i32
    return %c0_i32, %c0_i32_0, %c0_i32_1 : i32, i32, i32
  }
  func.func @transform_12(%arg0: i32) -> (i32, i32, i32) {
    %c0_i32 = arith.constant 0 : i32
    %c0_i32_0 = arith.constant 0 : i32
    %c0_i32_1 = arith.constant 0 : i32
    %c0_i32_2 = arith.constant 0 : i32
    return %c0_i32, %c0_i32_0, %c0_i32_1 : i32, i32, i32
  }
  func.func @transform_13(%arg0: i32) -> (i32, i32, i32) {
    %c0_i32 = arith.constant 0 : i32
    %c0_i32_0 = arith.constant 0 : i32
    %c0_i32_1 = arith.constant 0 : i32
    %c0_i32_2 = arith.constant 0 : i32
    return %c0_i32, %c0_i32_0, %c0_i32_1 : i32, i32, i32
  }
  func.func @transform_14(%arg0: i32) -> (i32, i32) {
    %c0_i32 = arith.constant 0 : i32
    %c0_i32_0 = arith.constant 0 : i32
    return %c0_i32, %arg0 : i32, i32
  }
  func.func @transform_15(%arg0: i32) -> (i32, i32, i32) {
    %c0_i32 = arith.constant 0 : i32
    %c0_i32_0 = arith.constant 0 : i32
    %c0_i32_1 = arith.constant 0 : i32
    return %arg0, %c0_i32, %c0_i32_0 : i32, i32, i32
  }
  func.func @transform_16(%arg0: i32) -> (i32, i32) {
    %c0_i32 = arith.constant 0 : i32
    %c0_i32_0 = arith.constant 0 : i32
    return %c0_i32, %arg0 : i32, i32
  }
}

</mosaic_0001>

<llo_original>
// kernel: tpu_custom_call.1
$region0: #{tpu_custom_call.1}
  #allocation0 [shape = 'u32[]', space=smem, size = 0x4, offset = 0x4, fixed_abs, tag = 'smem constant byte address 0x4 - core index']
  #allocation1 [shape = 'u32[144,128]{1,0:T(1,128)}', space=vmem, size = 0x12000, scoped, tag = 'internal scratch']
  %s0 = inlined_call_operand.vmem [shape: bf16[16,128], index: 0, kind: input, shape index: {}]
  %s1 = inlined_call_operand.vmem [shape: bf16[8,128], index: 1, kind: input, shape index: {}]
  %s2 = inlined_call_operand.hbm [shape: f32[16,128], index: 2, kind: input, shape index: {}, may-alias: {2,16}]
  %s3 = inlined_call_operand.vmem [shape: bf16[16,8], index: 3, kind: input, shape index: {}]
  %s4 = inlined_call_operand.vmem [shape: f32[16,1], index: 4, kind: input, shape index: {}]
  %s5 = inlined_call_operand.vmem [shape: bf16[16,16], index: 5, kind: input, shape index: {}]
  %s6 = inlined_call_operand.vmem [shape: f32[16,1], index: 6, kind: input, shape index: {}]
  %s7 = inlined_call_operand.vmem [shape: f32[16,1], index: 7, kind: input, shape index: {}]
  %s8 = inlined_call_operand.vmem [shape: bf16[2,16,16], index: 8, kind: input, shape index: {}]
  %s9 = inlined_call_operand.vmem [shape: f32[2,16,1], index: 9, kind: input, shape index: {}]
  %s10 = inlined_call_operand.vmem [shape: f32[2,16,1], index: 10, kind: input, shape index: {}]
  %s11 = inlined_call_operand.vmem [shape: bf16[2,16,16], index: 11, kind: input, shape index: {}]
  %s12 = inlined_call_operand.vmem [shape: f32[2,16,1], index: 12, kind: input, shape index: {}]
  %s13 = inlined_call_operand.vmem [shape: f32[2,16,1], index: 13, kind: input, shape index: {}]
  %s14 = inlined_call_operand.hbm [shape: f32[16,128], index: 14, kind: output, shape index: {0}]
  %s15 = inlined_call_operand.hbm [shape: f32[1,1,1], index: 15, kind: output, shape index: {1}]
  %s16 = inlined_call_operand.hbm [shape: f32[16,128], index: 16, kind: output, shape index: {2}, may-alias: {2,16}]
  %17 = xla_tuple %s14, %s15, %s16
  %s18 = sld [smem:[#allocation0]]
  $region86: #{tpu_custom_call.1} parent=0
    _
  %s20 = ssub.s32 1, %s18
  %s21 = scalar_select 0, %s20, %s18
  $region1: #{tpu_custom_call.1} parent=0
    #allocation2 [shape = 'u8[8192]{0}', space=vmem, size = 0x2000, scoped, tag = 'input window, operand 2, single buffered']
    #allocation3 [shape = 's32[1]{0}', space=sflag, size = 0x4, scoped, tag = 'scoped memory for tpu_custom_call.1']
    #allocation4 [shape = 's32[1]{0}', space=sflag, size = 0x4, scoped, tag = 'scoped memory for tpu_custom_call.1']
    #allocation5 [shape = 'u8[8192]{0}', space=vmem, size = 0x2000, scoped, tag = 'output window, operand 0, single buffered']
    #allocation6 [shape = 'u8[512]{0}', space=vmem, size = 0x400, scoped, tag = 'output window, operand 1, single buffered']
    #allocation7 [shape = 's32[1]{0}', space=sflag, size = 0x4, scoped, tag = 'scoped memory for tpu_custom_call.1']
    #allocation8 [shape = 'u8[8192]{0}', space=vmem, size = 0x2000, scoped, tag = 'output window, operand 2, single buffered']
    %22 = vsyncpa [#allocation3], 0
    %23 = vsyncpa [#allocation4], 0
    %24 = vsyncpa [#allocation7], 0
    // Predicated region
    $region2: #{tpu_custom_call.1} parent=1 // pred_check
      _
    $region3: #{tpu_custom_call.1} parent=1 // pred_check_branch
      %26 = sbr.rel (0) target = $region5
    $region4: #{tpu_custom_call.1} parent=1 // pred_region
      _
    $region5: #{tpu_custom_call.1} parent=1 // pred_fallthru
      _
    // Predicated region
    $region6: #{tpu_custom_call.1} parent=1 // pred_check
      _
    $region7: #{tpu_custom_call.1} parent=1 // pred_check_branch
      %28 = sbr.rel (0) target = $region9
    $region8: #{tpu_custom_call.1} parent=1 // pred_region
      _
    $region9: #{tpu_custom_call.1} parent=1 // pred_fallthru
      _
    // Predicated region
    $region10: #{tpu_custom_call.1} parent=1 // pred_check
      _
    $region11: #{tpu_custom_call.1} parent=1 // pred_check_branch
      %30 = sbr.rel (0) target = $region13
    $region12: #{tpu_custom_call.1} parent=1 // pred_region
      %s32 = ssub.s32 256, 256
      %33 = vsyncadd [#allocation3], %s32
      %s34 = sshll.u32 [#allocation2], 4
      %s35 = int_to_ptr.vmem [resolvable:$true] %s34
      %40 = dma.hbm_to_vmem [thread:$0]  %s2, 256, %s35, [#allocation3], 128, 128, 8
    $region13: #{tpu_custom_call.1} parent=1 // pred_fallthru
      _
    // Predicated region
    $region14: #{tpu_custom_call.1} parent=1 // pred_check
      _
    $region15: #{tpu_custom_call.1} parent=1 // pred_check_branch
      %42 = sbr.rel (0) target = $region17
    $region16: #{tpu_custom_call.1} parent=1 // pred_region
      _
    $region17: #{tpu_custom_call.1} parent=1 // pred_fallthru
      _
    // Predicated region
    $region18: #{tpu_custom_call.1} parent=1 // pred_check
      _
    $region19: #{tpu_custom_call.1} parent=1 // pred_check_branch
      %44 = sbr.rel (0) target = $region21
    $region20: #{tpu_custom_call.1} parent=1 // pred_region
      _
    $region21: #{tpu_custom_call.1} parent=1 // pred_fallthru
      _
    // Predicated region
    $region22: #{tpu_custom_call.1} parent=1 // pred_check
      _
    $region23: #{tpu_custom_call.1} parent=1 // pred_check_branch
      %46 = sbr.rel (0) target = $region25
    $region24: #{tpu_custom_call.1} parent=1 // pred_region
      _
    $region25: #{tpu_custom_call.1} parent=1 // pred_fallthru
      _
    // Predicated region
    $region26: #{tpu_custom_call.1} parent=1 // pred_check
      _
    $region27: #{tpu_custom_call.1} parent=1 // pred_check_branch
      %48 = sbr.rel (0) target = $region29
    $region28: #{tpu_custom_call.1} parent=1 // pred_region
      _
    $region29: #{tpu_custom_call.1} parent=1 // pred_fallthru
      _
    // Predicated region
    $region30: #{tpu_custom_call.1} parent=1 // pred_check
      _
    $region31: #{tpu_custom_call.1} parent=1 // pred_check_branch
      %50 = sbr.rel (0) target = $region33
    $region32: #{tpu_custom_call.1} parent=1 // pred_region
      _
    $region33: #{tpu_custom_call.1} parent=1 // pred_fallthru
      _
    // Predicated region
    $region34: #{tpu_custom_call.1} parent=1 // pred_check
      _
    $region35: #{tpu_custom_call.1} parent=1 // pred_check_branch
      %52 = sbr.rel (0) target = $region37
    $region36: #{tpu_custom_call.1} parent=1 // pred_region
      _
    $region37: #{tpu_custom_call.1} parent=1 // pred_fallthru
      _
    // Predicated region
    $region38: #{tpu_custom_call.1} parent=1 // pred_check
      _
    $region39: #{tpu_custom_call.1} parent=1 // pred_check_branch
      %54 = sbr.rel (0) target = $region41
    $region40: #{tpu_custom_call.1} parent=1 // pred_region
      _
    $region41: #{tpu_custom_call.1} parent=1 // pred_fallthru
      _
    // Predicated region
    $region42: #{tpu_custom_call.1} parent=1 // pred_check
      _
    $region43: #{tpu_custom_call.1} parent=1 // pred_check_branch
      %56 = sbr.rel (0) target = $region45
    $region44: #{tpu_custom_call.1} parent=1 // pred_region
      _
    $region45: #{tpu_custom_call.1} parent=1 // pred_fallthru
      _
    // Predicated region
    $region46: #{tpu_custom_call.1} parent=1 // pred_check
      _
    $region47: #{tpu_custom_call.1} parent=1 // pred_check_branch
      %58 = sbr.rel (0) target = $region49
    $region48: #{tpu_custom_call.1} parent=1 // pred_region
      _
    $region49: #{tpu_custom_call.1} parent=1 // pred_fallthru
      _
    // Predicated region
    $region50: #{tpu_custom_call.1} parent=1 // pred_check
      _
    $region51: #{tpu_custom_call.1} parent=1 // pred_check_branch
      %60 = sbr.rel (0) target = $region53
    $region52: #{tpu_custom_call.1} parent=1 // pred_region
      _
    $region53: #{tpu_custom_call.1} parent=1 // pred_fallthru
      _
    // Predicated region
    $region54: #{tpu_custom_call.1} parent=1 // pred_check
      _
    $region55: #{tpu_custom_call.1} parent=1 // pred_check_branch
      %62 = sbr.rel (0) target = $region57
    $region56: #{tpu_custom_call.1} parent=1 // pred_region
      _
    $region57: #{tpu_custom_call.1} parent=1 // pred_fallthru
      _
    // Predicated region
    $region58: #{tpu_custom_call.1} parent=1 // pred_check
      _
    $region59: #{tpu_custom_call.1} parent=1 // pred_check_branch
      %64 = sbr.rel (0) target = $region61
    $region60: #{tpu_custom_call.1} parent=1 // pred_region
      %65 = dma.done [#allocation3], 256
    $region61: #{tpu_custom_call.1} parent=1 // pred_fallthru
      _
    %v67 = vld [vmem:[#allocation2] sm:$0xff]
    %v68 = vld [vmem:[#allocation2 + $0x8] sm:$0xff]
    %v69 = vld [vmem:[%s3] sm:$0xf]
    %v70 = vld [vmem:[%s3 + $0x4] sm:$0xf]
    %v71 = vld [vmem:[%s1] sm:$0xf]
    %v72 = vld [vmem:[%s4] sm:$0xff]
    %v73 = vld [vmem:[%s4 + $0x8] sm:$0xff]
    %75 = vset.pattern.permute.xlu0 0
    %76 = vperm.xlu0 %75, %v72
    %v77 = vpop.permute.xlu0 %76
    %80 = vset.pattern.permute.xlu0 0
    %81 = vperm.xlu0 %80, %v73
    %v82 = vpop.permute.xlu0 %81
    %v86 = vunpack.c.l.b16 %v69
    %v87 = vunpack.c.l.b16 %v70
    %v88 = vpack.c.b16 %v87, %v86
    %vm89 = vcmask 64512
    %v91 = vsel %vm89, %v88, 0
    %vm93 = vcmask 1043456
    %v95 = vsel %vm93, %v71, 0
    %97 = vmatprep.subr.bf16.mxu0 0
    %98 = vmatpush1.bf16.msra.mxu0 %v95
    %99 = vmatprep.subr.bf16.mxu0 0
    %100 = vmatpush1.bf16.msra.mxu0 0
    %101 = vmatprep.subr.bf16.mxu0 0
    %102 = vmatpush1.bf16.msra.mxu0 0
    %103 = vmatprep.subr.bf16.mxu0 0
    %104 = vmatpush1.bf16.msra.mxu0 0
    %105 = vmatprep.subr.bf16.mxu0 0
    %106 = vmatpush1.bf16.msra.mxu0 0
    %107 = vmatprep.subr.bf16.mxu0 0
    %108 = vmatpush1.bf16.msra.mxu0 0
    %109 = vmatprep.subr.bf16.mxu0 0
    %110 = vmatpush1.bf16.msra.mxu0 0
    %111 = vmatprep.subr.bf16.mxu0 0
    %112 = vmatpush1.bf16.msra.mxu0 0
    %113 = vmatprep.subr.bf16.mxu0 0
    %114 = vmatpush1.bf16.msra.mxu0 0
    %115 = vmatprep.subr.bf16.mxu0 0
    %116 = vmatpush1.bf16.msra.mxu0 0
    %117 = vmatprep.subr.bf16.mxu0 0
    %118 = vmatpush1.bf16.msra.mxu0 0
    %119 = vmatprep.subr.bf16.mxu0 0
    %120 = vmatpush1.bf16.msra.mxu0 0
    %121 = vmatprep.subr.bf16.mxu0 0
    %122 = vmatpush1.bf16.msra.mxu0 0
    %123 = vmatprep.subr.bf16.mxu0 0
    %124 = vmatpush1.bf16.msra.mxu0 0
    %125 = vmatprep.subr.bf16.mxu0 0
    %126 = vmatpush1.bf16.msra.mxu0 0
    %127 = vmatprep.subr.bf16.mxu0 0
    %128 = vmatpush1.bf16.msra.mxu0 0
    %129 = vmatprep.mubr.bf16.mxu0 0
    %130 = vmatmul.mubr.bf16.gmra.mrb[0].mxu0 %v91
    %v131 = vpop.f32.mrb[0].mxu0
    %v132 = vadd.f32 %v77, %v131
    %v133 = vpop.f32.mrb[0].mxu0
    %v134 = vpop.f32.mrb[0].mxu0
    %v135 = vadd.f32 %v82, %v134
    %v136 = vpop.f32.mrb[0].mxu0
    %137 = vdwg.mxu0
    %v138 = vmul.f32 %v132, %v67
    %v139 = vmul.f32 %v135, %v68
    %v140 = vxor.u32 %v138, 2147483648
    %v141 = vxor.u32 %v139, 2147483648
    %v142 = vmul.f32 %v140, 1.442695
    %v143 = vpow.pop %v142
    %v144 = vmul.f32 %v141, 1.442695
    %v145 = vpow.pop %v144
    %v146 = vadd.f32 %v143, 1.0
    %v147 = vadd.f32 %v145, 1.0
    %v148 = vrcp.pop %v146
    %v149 = vmul.f32 1.0, %v148
    %v150 = vrcp.pop %v147
    %v151 = vmul.f32 1.0, %v150
    %v152 = vsub.f32 1.3, %v149
    %v153 = vsub.f32 1.3, %v151
    %v154 = vmul.f32 %v67, %v152
    %v155 = vmul.f32 %v68, %v153
    %156 = vst [vmem:[#allocation8] sm:$0xff] %v154
    %157 = vst [vmem:[#allocation8 + $0x8] sm:$0xff] %v155
    %s158 = smul.u32 0, 128
    %v159 = vlaneseq
    %v160 = vand.u32 %v159, 127
    %v161 = vstv %s158
    %v162 = vadd.s32 %v161, %v160
    %vm163 = vcmp.lt.s32.totalorder %v162, 8
    %v164 = vsub.f32 0.0, %v149
    %v165 = vsub.f32 0.0, %v151
    %v166 = vadd.f32 %v149, 1e-10
    %v167 = vadd.f32 %v151, 1e-10
    %v168 = vlog2.pop %v166
    %v169 = vmul.f32 %v168, 0.6931472
    %v170 = vlog2.pop %v167
    %v171 = vmul.f32 %v170, 0.6931472
    %v172 = vmul.f32 %v164, %v169
    %v173 = vmul.f32 %v165, %v171
    %v174 = vsel %vm163, 1, 0
    %vm175 = vcmp.eq.s32.totalorder %v174, 1
    %v176 = vsel %vm175, %v172, 0.0
    %v177 = vsel %vm175, %v173, 0.0
    %v178 = vadd.f32 %v176, %v177
    %179 = vadd.xlane.f32.xlu0 %v178
    %v180 = vpop.xlane.xlu0 %179
    %v181 = vrot.slane %v180, 4
    %v182 = vadd.f32 %v180, %v181
    %v183 = vrot.slane %v182, 2
    %v184 = vadd.f32 %v182, %v183
    %v185 = vrot.slane %v184, 1
    %v186 = vadd.f32 %v184, %v185
    %s187 = vtos %v186
    %v188 = vstv %s187
    %vm189 = vcmask 0
    %190 = vst.msk [vmem:[#allocation6] sm:$0x1] %vm189, %v188
    %v191 = vld [vmem:[%s0] sm:$0xf]
    %v192 = vld [vmem:[%s0 + $0x4] sm:$0xf]
    %v193 = vunpack.c.l.bf16 %v191
    %v194 = vunpack.c.l.bf16 %v192
    %v195 = vmul.f32 %v193, %v149
    %v196 = vmul.f32 %v194, %v151
    %v197 = vpack.c.bf16 %v196, %v195
    %v198 = vld [vmem:[%s5] sm:$0xf]
    %v199 = vld [vmem:[%s5 + $0x4] sm:$0xf]
    %v200 = vld [vmem:[%s6] sm:$0xff]
    %v201 = vld [vmem:[%s6 + $0x8] sm:$0xff]
    %v202 = vld [vmem:[%s7] sm:$0xff]
    %v203 = vld [vmem:[%s7 + $0x8] sm:$0xff]
    %205 = vset.pattern.permute.xlu0 0
    %206 = vperm.xlu0 %205, %v200
    %v207 = vpop.permute.xlu0 %206
    %210 = vset.pattern.permute.xlu0 0
    %211 = vperm.xlu0 %210, %v201
    %v212 = vpop.permute.xlu0 %211
    %v216 = vunpack.c.l.b16 %v198
    %v217 = vunpack.c.l.b16 %v199
    %v218 = vpack.c.b16 %v217, %v216
    %vm219 = vcmask 130048
    %v221 = vsel %vm219, %v218, 0
    %223 = vmatprep.subr.bf16.mxu0 0
    %224 = vmatpush1.bf16.msra.mxu0 %v197
    %225 = vmatprep.subr.bf16.mxu0 0
    %226 = vmatpush1.bf16.msra.mxu0 0
    %227 = vmatprep.subr.bf16.mxu0 0
    %228 = vmatpush1.bf16.msra.mxu0 0
    %229 = vmatprep.subr.bf16.mxu0 0
    %230 = vmatpush1.bf16.msra.mxu0 0
    %231 = vmatprep.subr.bf16.mxu0 0
    %232 = vmatpush1.bf16.msra.mxu0 0
    %233 = vmatprep.subr.bf16.mxu0 0
    %234 = vmatpush1.bf16.msra.mxu0 0
    %235 = vmatprep.subr.bf16.mxu0 0
    %236 = vmatpush1.bf16.msra.mxu0 0
    %237 = vmatprep.subr.bf16.mxu0 0
    %238 = vmatpush1.bf16.msra.mxu0 0
    %239 = vmatprep.subr.bf16.mxu0 0
    %240 = vmatpush1.bf16.msra.mxu0 0
    %241 = vmatprep.subr.bf16.mxu0 0
    %242 = vmatpush1.bf16.msra.mxu0 0
    %243 = vmatprep.subr.bf16.mxu0 0
    %244 = vmatpush1.bf16.msra.mxu0 0
    %245 = vmatprep.subr.bf16.mxu0 0
    %246 = vmatpush1.bf16.msra.mxu0 0
    %247 = vmatprep.subr.bf16.mxu0 0
    %248 = vmatpush1.bf16.msra.mxu0 0
    %249 = vmatprep.subr.bf16.mxu0 0
    %250 = vmatpush1.bf16.msra.mxu0 0
    %251 = vmatprep.subr.bf16.mxu0 0
    %252 = vmatpush1.bf16.msra.mxu0 0
    %253 = vmatprep.subr.bf16.mxu0 0
    %254 = vmatpush1.bf16.msra.mxu0 0
    %255 = vmatprep.mubr.bf16.mxu0 0
    %256 = vmatmul.mubr.bf16.gmra.mrb[0].mxu0 %v221
    %v257 = vpop.f32.mrb[0].mxu0
    %v258 = vadd.f32 %v207, %v257
    %v259 = vpop.f32.mrb[0].mxu0
    %v260 = vpop.f32.mrb[0].mxu0
    %v261 = vadd.f32 %v212, %v260
    %v262 = vpop.f32.mrb[0].mxu0
    %263 = vdwg.mxu0
    %v264 = vmul.f32 %v258, 0.01
    %v265 = vmul.f32 %v261, 0.01
    %v266 = vmax.f32 %v258, %v264
    %v267 = vmax.f32 %v261, %v265
    %269 = vset.pattern.permute.xlu0 0
    %270 = vperm.xlu0 %269, %v202
    %v271 = vpop.permute.xlu0 %270
    %274 = vset.pattern.permute.xlu0 0
    %275 = vperm.xlu0 %274, %v203
    %v276 = vpop.permute.xlu0 %275
    %v278 = vadd.f32 %v266, %v271
    %v279 = vadd.f32 %v267, %v276
    %v280 = vpack.c.bf16 %v279, %v278
    %v281 = vld [vmem:[%s8] sm:$0xf]
    %v282 = vld [vmem:[%s8 + $0x4] sm:$0xf]
    %v283 = vld [vmem:[%s9] sm:$0xff]
    %v284 = vld [vmem:[%s9 + $0x8] sm:$0xff]
    %v285 = vld [vmem:[%s10] sm:$0xff]
    %v286 = vld [vmem:[%s10 + $0x8] sm:$0xff]
    %288 = vset.pattern.permute.xlu0 0
    %289 = vperm.xlu0 %288, %v283
    %v290 = vpop.permute.xlu0 %289
    %293 = vset.pattern.permute.xlu0 0
    %294 = vperm.xlu0 %293, %v284
    %v295 = vpop.permute.xlu0 %294
    %v299 = vunpack.c.l.b16 %v281
    %v300 = vunpack.c.l.b16 %v282
    %v301 = vpack.c.b16 %v300, %v299
    %v303 = vsel %vm219, %v301, 0
    %305 = vmatprep.subr.bf16.mxu0 0
    %306 = vmatpush1.bf16.msra.mxu0 %v280
    %307 = vmatprep.subr.bf16.mxu0 0
    %308 = vmatpush1.bf16.msra.mxu0 0
    %309 = vmatprep.subr.bf16.mxu0 0
    %310 = vmatpush1.bf16.msra.mxu0 0
    %311 = vmatprep.subr.bf16.mxu0 0
    %312 = vmatpush1.bf16.msra.mxu0 0
    %313 = vmatprep.subr.bf16.mxu0 0
    %314 = vmatpush1.bf16.msra.mxu0 0
    %315 = vmatprep.subr.bf16.mxu0 0
    %316 = vmatpush1.bf16.msra.mxu0 0
    %317 = vmatprep.subr.bf16.mxu0 0
    %318 = vmatpush1.bf16.msra.mxu0 0
    %319 = vmatprep.subr.bf16.mxu0 0
    %320 = vmatpush1.bf16.msra.mxu0 0
    %321 = vmatprep.subr.bf16.mxu0 0
    %322 = vmatpush1.bf16.msra.mxu0 0
    %323 = vmatprep.subr.bf16.mxu0 0
    %324 = vmatpush1.bf16.msra.mxu0 0
    %325 = vmatprep.subr.bf16.mxu0 0
    %326 = vmatpush1.bf16.msra.mxu0 0
    %327 = vmatprep.subr.bf16.mxu0 0
    %328 = vmatpush1.bf16.msra.mxu0 0
    %329 = vmatprep.subr.bf16.mxu0 0
    %330 = vmatpush1.bf16.msra.mxu0 0
    %331 = vmatprep.subr.bf16.mxu0 0
    %332 = vmatpush1.bf16.msra.mxu0 0
    %333 = vmatprep.subr.bf16.mxu0 0
    %334 = vmatpush1.bf16.msra.mxu0 0
    %335 = vmatprep.subr.bf16.mxu0 0
    %336 = vmatpush1.bf16.msra.mxu0 0
    %337 = vmatprep.mubr.bf16.mxu0 0
    %338 = vmatmul.mubr.bf16.gmra.mrb[0].mxu0 %v303
    %v339 = vpop.f32.mrb[0].mxu0
    %v340 = vadd.f32 %v290, %v339
    %v341 = vpop.f32.mrb[0].mxu0
    %v342 = vpop.f32.mrb[0].mxu0
    %v343 = vadd.f32 %v295, %v342
    %v344 = vpop.f32.mrb[0].mxu0
    %345 = vdwg.mxu0
    %v346 = vmul.f32 %v340, 0.01
    %v347 = vmul.f32 %v343, 0.01
    %v348 = vmax.f32 %v340, %v346
    %v349 = vmax.f32 %v343, %v347
    %351 = vset.pattern.permute.xlu0 0
    %352 = vperm.xlu0 %351, %v285
    %v353 = vpop.permute.xlu0 %352
    %356 = vset.pattern.permute.xlu0 0
    %357 = vperm.xlu0 %356, %v286
    %v358 = vpop.permute.xlu0 %357
    %v360 = vadd.f32 %v348, %v353
    %v361 = vadd.f32 %v349, %v358
    %v362 = vld [vmem:[%s11] sm:$0xf]
    %v363 = vld [vmem:[%s11 + $0x4] sm:$0xf]
    %v364 = vld [vmem:[%s12] sm:$0xff]
    %v365 = vld [vmem:[%s12 + $0x8] sm:$0xff]
    %v366 = vld [vmem:[%s13] sm:$0xff]
    %v367 = vld [vmem:[%s13 + $0x8] sm:$0xff]
    %369 = vset.pattern.permute.xlu0 0
    %370 = vperm.xlu0 %369, %v364
    %v371 = vpop.permute.xlu0 %370
    %374 = vset.pattern.permute.xlu0 0
    %375 = vperm.xlu0 %374, %v365
    %v376 = vpop.permute.xlu0 %375
    %v380 = vunpack.c.l.b16 %v362
    %v381 = vunpack.c.l.b16 %v363
    %v382 = vpack.c.b16 %v381, %v380
    %v384 = vsel %vm219, %v382, 0
    %386 = vmatprep.subr.bf16.mxu0 0
    %387 = vmatpush1.bf16.msra.mxu0 %v280
    %388 = vmatprep.subr.bf16.mxu0 0
    %389 = vmatpush1.bf16.msra.mxu0 0
    %390 = vmatprep.subr.bf16.mxu0 0
    %391 = vmatpush1.bf16.msra.mxu0 0
    %392 = vmatprep.subr.bf16.mxu0 0
    %393 = vmatpush1.bf16.msra.mxu0 0
    %394 = vmatprep.subr.bf16.mxu0 0
    %395 = vmatpush1.bf16.msra.mxu0 0
    %396 = vmatprep.subr.bf16.mxu0 0
    %397 = vmatpush1.bf16.msra.mxu0 0
    %398 = vmatprep.subr.bf16.mxu0 0
    %399 = vmatpush1.bf16.msra.mxu0 0
    %400 = vmatprep.subr.bf16.mxu0 0
    %401 = vmatpush1.bf16.msra.mxu0 0
    %402 = vmatprep.subr.bf16.mxu0 0
    %403 = vmatpush1.bf16.msra.mxu0 0
    %404 = vmatprep.subr.bf16.mxu0 0
    %405 = vmatpush1.bf16.msra.mxu0 0
    %406 = vmatprep.subr.bf16.mxu0 0
    %407 = vmatpush1.bf16.msra.mxu0 0
    %408 = vmatprep.subr.bf16.mxu0 0
    %409 = vmatpush1.bf16.msra.mxu0 0
    %410 = vmatprep.subr.bf16.mxu0 0
    %411 = vmatpush1.bf16.msra.mxu0 0
    %412 = vmatprep.subr.bf16.mxu0 0
    %413 = vmatpush1.bf16.msra.mxu0 0
    %414 = vmatprep.subr.bf16.mxu0 0
    %415 = vmatpush1.bf16.msra.mxu0 0
    %416 = vmatprep.subr.bf16.mxu0 0
    %417 = vmatpush1.bf16.msra.mxu0 0
    %418 = vmatprep.mubr.bf16.mxu0 0
    %419 = vmatmul.mubr.bf16.gmra.mrb[0].mxu0 %v384
    %v420 = vpop.f32.mrb[0].mxu0
    %v421 = vadd.f32 %v371, %v420
    %v422 = vpop.f32.mrb[0].mxu0
    %v423 = vpop.f32.mrb[0].mxu0
    %v424 = vadd.f32 %v376, %v423
    %v425 = vpop.f32.mrb[0].mxu0
    %426 = vdwg.mxu0
    %v427 = vmul.f32 %v421, 0.01
    %v428 = vmul.f32 %v424, 0.01
    %v429 = vmax.f32 %v421, %v427
    %v430 = vmax.f32 %v424, %v428
    %432 = vset.pattern.permute.xlu0 0
    %433 = vperm.xlu0 %432, %v366
    %v434 = vpop.permute.xlu0 %433
    %437 = vset.pattern.permute.xlu0 0
    %438 = vperm.xlu0 %437, %v367
    %v439 = vpop.permute.xlu0 %438
    %v441 = vadd.f32 %v429, %v434
    %v442 = vadd.f32 %v430, %v439
    %v443 = vxor.u32 %v441, 2147483648
    %v444 = vxor.u32 %v442, 2147483648
    %v445 = vmul.f32 %v443, 1.442695
    %v446 = vpow.pop %v445
    %v447 = vmul.f32 %v444, 1.442695
    %v448 = vpow.pop %v447
    %v449 = vadd.f32 %v446, 1.0
    %v450 = vadd.f32 %v448, 1.0
    %v451 = vrcp.pop %v449
    %v452 = vmul.f32 1.0, %v451
    %v453 = vrcp.pop %v450
    %v454 = vmul.f32 1.0, %v453
    %v455 = vmul.f32 %v360, %v452
    %v456 = vmul.f32 %v361, %v454
    %v457 = vadd.f32 %v278, %v455
    %v458 = vadd.f32 %v279, %v456
    %v459 = vmul.f32 %v457, 0.70710677
    %v460 = vmul.f32 %v458, 0.70710677
    %v461 = vpack.c.bf16 %v460, %v459
    %s462 = scalar_lea.vmem %s8, 8
    %v463 = vld [vmem:[%s462] sm:$0xf]
    %v464 = vld [vmem:[%s462 + $0x4] sm:$0xf]
    %s465 = scalar_lea.vmem %s9, 16
    %v466 = vld [vmem:[%s465] sm:$0xff]
    %v467 = vld [vmem:[%s465 + $0x8] sm:$0xff]
    %s468 = scalar_lea.vmem %s10, 16
    %v469 = vld [vmem:[%s468] sm:$0xff]
    %v470 = vld [vmem:[%s468 + $0x8] sm:$0xff]
    %472 = vset.pattern.permute.xlu0 0
    %473 = vperm.xlu0 %472, %v466
    %v474 = vpop.permute.xlu0 %473
    %477 = vset.pattern.permute.xlu0 0
    %478 = vperm.xlu0 %477, %v467
    %v479 = vpop.permute.xlu0 %478
    %v483 = vunpack.c.l.b16 %v463
    %v484 = vunpack.c.l.b16 %v464
    %v485 = vpack.c.b16 %v484, %v483
    %v487 = vsel %vm219, %v485, 0
    %489 = vmatprep.subr.bf16.mxu0 0
    %490 = vmatpush1.bf16.msra.mxu0 %v461
    %491 = vmatprep.subr.bf16.mxu0 0
    %492 = vmatpush1.bf16.msra.mxu0 0
    %493 = vmatprep.subr.bf16.mxu0 0
    %494 = vmatpush1.bf16.msra.mxu0 0
    %495 = vmatprep.subr.bf16.mxu0 0
    %496 = vmatpush1.bf16.msra.mxu0 0
    %497 = vmatprep.subr.bf16.mxu0 0
    %498 = vmatpush1.bf16.msra.mxu0 0
    %499 = vmatprep.subr.bf16.mxu0 0
    %500 = vmatpush1.bf16.msra.mxu0 0
    %501 = vmatprep.subr.bf16.mxu0 0
    %502 = vmatpush1.bf16.msra.mxu0 0
    %503 = vmatprep.subr.bf16.mxu0 0
    %504 = vmatpush1.bf16.msra.mxu0 0
    %505 = vmatprep.subr.bf16.mxu0 0
    %506 = vmatpush1.bf16.msra.mxu0 0
    %507 = vmatprep.subr.bf16.mxu0 0
    %508 = vmatpush1.bf16.msra.mxu0 0
    %509 = vmatprep.subr.bf16.mxu0 0
    %510 = vmatpush1.bf16.msra.mxu0 0
    %511 = vmatprep.subr.bf16.mxu0 0
    %512 = vmatpush1.bf16.msra.mxu0 0
    %513 = vmatprep.subr.bf16.mxu0 0
    %514 = vmatpush1.bf16.msra.mxu0 0
    %515 = vmatprep.subr.bf16.mxu0 0
    %516 = vmatpush1.bf16.msra.mxu0 0
    %517 = vmatprep.subr.bf16.mxu0 0
    %518 = vmatpush1.bf16.msra.mxu0 0
    %519 = vmatprep.subr.bf16.mxu0 0
    %520 = vmatpush1.bf16.msra.mxu0 0
    %521 = vmatprep.mubr.bf16.mxu0 0
    %522 = vmatmul.mubr.bf16.gmra.mrb[0].mxu0 %v487
    %v523 = vpop.f32.mrb[0].mxu0
    %v524 = vadd.f32 %v474, %v523
    %v525 = vpop.f32.mrb[0].mxu0
    %v526 = vpop.f32.mrb[0].mxu0
    %v527 = vadd.f32 %v479, %v526
    %v528 = vpop.f32.mrb[0].mxu0
    %529 = vdwg.mxu0
    %v530 = vmul.f32 %v524, 0.01
    %v531 = vmul.f32 %v527, 0.01
    %v532 = vmax.f32 %v524, %v530
    %v533 = vmax.f32 %v527, %v531
    %535 = vset.pattern.permute.xlu0 0
    %536 = vperm.xlu0 %535, %v469
    %v537 = vpop.permute.xlu0 %536
    %540 = vset.pattern.permute.xlu0 0
    %541 = vperm.xlu0 %540, %v470
    %v542 = vpop.permute.xlu0 %541
    %v544 = vadd.f32 %v532, %v537
    %v545 = vadd.f32 %v533, %v542
    %s546 = scalar_lea.vmem %s11, 8
    %v547 = vld [vmem:[%s546] sm:$0xf]
    %v548 = vld [vmem:[%s546 + $0x4] sm:$0xf]
    %s549 = scalar_lea.vmem %s12, 16
    %v550 = vld [vmem:[%s549] sm:$0xff]
    %v551 = vld [vmem:[%s549 + $0x8] sm:$0xff]
    %s552 = scalar_lea.vmem %s13, 16
    %v553 = vld [vmem:[%s552] sm:$0xff]
    %v554 = vld [vmem:[%s552 + $0x8] sm:$0xff]
    %556 = vset.pattern.permute.xlu0 0
    %557 = vperm.xlu0 %556, %v550
    %v558 = vpop.permute.xlu0 %557
    %561 = vset.pattern.permute.xlu0 0
    %562 = vperm.xlu0 %561, %v551
    %v563 = vpop.permute.xlu0 %562
    %v567 = vunpack.c.l.b16 %v547
    %v568 = vunpack.c.l.b16 %v548
    %v569 = vpack.c.b16 %v568, %v567
    %v571 = vsel %vm219, %v569, 0
    %573 = vmatprep.subr.bf16.mxu0 0
    %574 = vmatpush1.bf16.msra.mxu0 %v461
    %575 = vmatprep.subr.bf16.mxu0 0
    %576 = vmatpush1.bf16.msra.mxu0 0
    %577 = vmatprep.subr.bf16.mxu0 0
    %578 = vmatpush1.bf16.msra.mxu0 0
    %579 = vmatprep.subr.bf16.mxu0 0
    %580 = vmatpush1.bf16.msra.mxu0 0
    %581 = vmatprep.subr.bf16.mxu0 0
    %582 = vmatpush1.bf16.msra.mxu0 0
    %583 = vmatprep.subr.bf16.mxu0 0
    %584 = vmatpush1.bf16.msra.mxu0 0
    %585 = vmatprep.subr.bf16.mxu0 0
    %586 = vmatpush1.bf16.msra.mxu0 0
    %587 = vmatprep.subr.bf16.mxu0 0
    %588 = vmatpush1.bf16.msra.mxu0 0
    %589 = vmatprep.subr.bf16.mxu0 0
    %590 = vmatpush1.bf16.msra.mxu0 0
    %591 = vmatprep.subr.bf16.mxu0 0
    %592 = vmatpush1.bf16.msra.mxu0 0
    %593 = vmatprep.subr.bf16.mxu0 0
    %594 = vmatpush1.bf16.msra.mxu0 0
    %595 = vmatprep.subr.bf16.mxu0 0
    %596 = vmatpush1.bf16.msra.mxu0 0
    %597 = vmatprep.subr.bf16.mxu0 0
    %598 = vmatpush1.bf16.msra.mxu0 0
    %599 = vmatprep.subr.bf16.mxu0 0
    %600 = vmatpush1.bf16.msra.mxu0 0
    %601 = vmatprep.subr.bf16.mxu0 0
    %602 = vmatpush1.bf16.msra.mxu0 0
    %603 = vmatprep.subr.bf16.mxu0 0
    %604 = vmatpush1.bf16.msra.mxu0 0
    %605 = vmatprep.mubr.bf16.mxu0 0
    %606 = vmatmul.mubr.bf16.gmra.mrb[0].mxu0 %v571
    %v607 = vpop.f32.mrb[0].mxu0
    %v608 = vadd.f32 %v558, %v607
    %v609 = vpop.f32.mrb[0].mxu0
    %v610 = vpop.f32.mrb[0].mxu0
    %v611 = vadd.f32 %v563, %v610
    %v612 = vpop.f32.mrb[0].mxu0
    %613 = vdwg.mxu0
    %v614 = vmul.f32 %v608, 0.01
    %v615 = vmul.f32 %v611, 0.01
    %v616 = vmax.f32 %v608, %v614
    %v617 = vmax.f32 %v611, %v615
    %619 = vset.pattern.permute.xlu0 0
    %620 = vperm.xlu0 %619, %v553
    %v621 = vpop.permute.xlu0 %620
    %624 = vset.pattern.permute.xlu0 0
    %625 = vperm.xlu0 %624, %v554
    %v626 = vpop.permute.xlu0 %625
    %v628 = vadd.f32 %v616, %v621
    %v629 = vadd.f32 %v617, %v626
    %v630 = vxor.u32 %v628, 2147483648
    %v631 = vxor.u32 %v629, 2147483648
    %v632 = vmul.f32 %v630, 1.442695
    %v633 = vpow.pop %v632
    %v634 = vmul.f32 %v631, 1.442695
    %v635 = vpow.pop %v634
    %v636 = vadd.f32 %v633, 1.0
    %v637 = vadd.f32 %v635, 1.0
    %v638 = vrcp.pop %v636
    %v639 = vmul.f32 1.0, %v638
    %v640 = vrcp.pop %v637
    %v641 = vmul.f32 1.0, %v640
    %v642 = vmul.f32 %v544, %v639
    %v643 = vmul.f32 %v545, %v641
    %v644 = vadd.f32 %v459, %v642
    %v645 = vadd.f32 %v460, %v643
    %v646 = vmul.f32 %v644, 0.70710677
    %v647 = vmul.f32 %v645, 0.70710677
    %648 = vst [vmem:[#allocation5] sm:$0xff] %v646
    %649 = vst [vmem:[#allocation5 + $0x8] sm:$0xff] %v647
    // Predicated region
    $region62: #{tpu_custom_call.1} parent=1 // pred_check
      _
    $region63: #{tpu_custom_call.1} parent=1 // pred_check_branch
      %651 = sbr.rel (0) target = $region65
    $region64: #{tpu_custom_call.1} parent=1 // pred_region
      %s653 = ssub.s32 256, 256
      %654 = vsyncadd [#allocation4], %s653
      %s655 = sshll.u32 [#allocation5], 4
      %s656 = int_to_ptr.vmem [resolvable:$true] %s655
      %661 = dma.vmem_to_hbm [thread:$0]  %s656, 256, %s14, [#allocation4], 128, 128, 8
    $region65: #{tpu_custom_call.1} parent=1 // pred_fallthru
      _
    // Predicated region
    $region66: #{tpu_custom_call.1} parent=1 // pred_check
      _
    $region67: #{tpu_custom_call.1} parent=1 // pred_check_branch
      %663 = sbr.rel (0) target = $region69
    $region68: #{tpu_custom_call.1} parent=1 // pred_region
      %s665 = ssub.s32 16, 16
      %666 = vsyncadd [#allocation7], %s665
      %s668 = sshll.u32 [#allocation6], 4
      %s669 = int_to_ptr.vmem [resolvable:$true] %s668
      %671 = dma.vmem_to_hbm [thread:$0]  %s669, 16, %s15, [#allocation7]
    $region69: #{tpu_custom_call.1} parent=1 // pred_fallthru
      _
    // Predicated region
    $region70: #{tpu_custom_call.1} parent=1 // pred_check
      _
    $region71: #{tpu_custom_call.1} parent=1 // pred_check_branch
      %673 = sbr.rel (0) target = $region73
    $region72: #{tpu_custom_call.1} parent=1 // pred_region
      %s675 = ssub.s32 256, 256
      %676 = vsyncadd [#allocation7], %s675
      %s677 = sshll.u32 [#allocation8], 4
      %s678 = int_to_ptr.vmem [resolvable:$true] %s677
      %683 = dma.vmem_to_hbm [thread:$0]  %s678, 256, %s16, [#allocation7], 128, 128, 8
    $region73: #{tpu_custom_call.1} parent=1 // pred_fallthru
      _
    // Predicated region
    $region74: #{tpu_custom_call.1} parent=1 // pred_check
      _
    $region75: #{tpu_custom_call.1} parent=1 // pred_check_branch
      %685 = sbr.rel (0) target = $region77
    $region76: #{tpu_custom_call.1} parent=1 // pred_region
      %686 = dma.done [#allocation4], 256
    $region77: #{tpu_custom_call.1} parent=1 // pred_fallthru
      _
    // Predicated region
    $region78: #{tpu_custom_call.1} parent=1 // pred_check
      _
    $region79: #{tpu_custom_call.1} parent=1 // pred_check_branch
      %688 = sbr.rel (0) target = $region81
    $region80: #{tpu_custom_call.1} parent=1 // pred_region
      %689 = dma.done [#allocation7], 16
    $region81: #{tpu_custom_call.1} parent=1 // pred_fallthru
      _
    // Predicated region
    $region82: #{tpu_custom_call.1} parent=1 // pred_check
      _
    $region83: #{tpu_custom_call.1} parent=1 // pred_check_branch
      %691 = sbr.rel (0) target = $region85
    $region84: #{tpu_custom_call.1} parent=1 // pred_region
      %692 = dma.done [#allocation7], 256
    $region85: #{tpu_custom_call.1} parent=1 // pred_fallthru
      _
    %693 = vsyncpa [#allocation3], 1
    %694 = vsyncpa [#allocation4], 1
    %695 = vsyncpa [#allocation7], 1

</llo_original>
